<compile_context>
chip_gen: v7x
topology: tpu7x:2x2x1
jax: 0.10.0
libtpu: 0.0.40
codegen_flags: <defaults>
</compile_context>

<pallas_src>
import functools

import jax
import jax.numpy as jnp
from jax import lax
from jax.experimental import pallas as pl
from jax.experimental.pallas import tpu as pltpu

_VMEM_LIMIT = 32 * 1024 * 1024          # scoped-VMEM cap; safe on v5e/v6e/v7x
_LSTM_CHUNK_BYTES = 4 * 1024 * 1024     # per-block byte budget for streamed recurrence


def _round_up(x, m):
    return ((x + m - 1) // m) * m


# --------------------------------------------------------------------------
# Conv1d (+folded BN) kernel: K taps accumulated in-kernel, optional fused
# residual add + ReLU epilogue.  Grid over batch; input read once (no im2col).
# --------------------------------------------------------------------------

def _conv_accum(x_ref, w_ref, K, stride, Tout, Np):
    acc = jnp.zeros((Tout, Np), jnp.float32)
    for k in range(K):
        if stride == 1:
            xk = x_ref[pl.ds(k, Tout), :]
        else:
            xk = x_ref[pl.ds(k, Tout, stride=stride), :]
        acc += jnp.dot(xk, w_ref[k], preferred_element_type=jnp.float32)
    return acc


def _conv_kernel(x_ref, w_ref, b_ref, o_ref, *, K, stride, relu):
    Tout, Np = o_ref.shape
    acc = _conv_accum(x_ref, w_ref, K, stride, Tout, Np) + b_ref[...]
    if relu:
        acc = jnp.maximum(acc, 0.0)
    o_ref[...] = acc.astype(o_ref.dtype)


def _conv_res_kernel(x_ref, w_ref, b_ref, s_ref, o_ref, *, K, stride, relu):
    Tout, Np = o_ref.shape
    acc = _conv_accum(x_ref, w_ref, K, stride, Tout, Np)
    acc = acc + b_ref[...] + s_ref[...].astype(jnp.float32)
    if relu:
        acc = jnp.maximum(acc, 0.0)
    o_ref[...] = acc.astype(o_ref.dtype)


def conv1d_bn(x, w, b, stride=1, relu=False, shortcut=None):
    """Conv1d (padding=(K-1)//2) with BN folded into (w, b); optional fused
    residual add + ReLU.  x: (B, T, Cin); w: (Cout, Cin, K) PyTorch layout.
    Output: (B, Tout, Cout) bf16."""
    B, T, Cin = x.shape
    Cout, _, K = w.shape
    pad = (K - 1) // 2
    Tp = T + 2 * pad
    Tout = (Tp - K) // stride + 1
    Np = _round_up(Cout, 128)

    xp = jnp.pad(x.astype(jnp.bfloat16), ((0, 0), (pad, pad), (0, 0)))
    wt = jnp.transpose(w, (2, 1, 0)).astype(jnp.bfloat16)          # (K, Cin, Cout)
    wt = jnp.pad(wt, ((0, 0), (0, 0), (0, Np - Cout)))
    bias = jnp.pad(b.astype(jnp.float32), (0, Np - Cout)).reshape(1, Np)

    in_specs = [
        pl.BlockSpec((None, Tp, Cin), lambda bi: (bi, 0, 0)),
        pl.BlockSpec((K, Cin, Np), lambda bi: (0, 0, 0)),
        pl.BlockSpec((1, Np), lambda bi: (0, 0)),
    ]
    args = [xp, wt, bias]
    if shortcut is None:
        kernel = functools.partial(_conv_kernel, K=K, stride=stride, relu=relu)
    else:
        sc = jnp.pad(shortcut.astype(jnp.bfloat16),
                     ((0, 0), (0, 0), (0, Np - Cout)))
        in_specs.append(pl.BlockSpec((None, Tout, Np), lambda bi: (bi, 0, 0)))
        args.append(sc)
        kernel = functools.partial(_conv_res_kernel, K=K, stride=stride, relu=relu)

    out = pl.pallas_call(
        kernel,
        out_shape=jax.ShapeDtypeStruct((B, Tout, Np), jnp.bfloat16),
        grid=(B,),
        in_specs=in_specs,
        out_specs=pl.BlockSpec((None, Tout, Np), lambda bi: (bi, 0, 0)),
        compiler_params=pltpu.CompilerParams(
            dimension_semantics=("parallel",),
            vmem_limit_bytes=_VMEM_LIMIT),
    )(*args)
    return out[:, :, :Cout]


def res_block(x, p, stride):
    h1 = conv1d_bn(x, p['w1'], p['b1'], stride=stride, relu=True)   # conv+BN+ReLU
    s = conv1d_bn(x, p['ws'], p['bs'], stride=stride, relu=False)   # 1x1 shortcut+BN
    # second conv+BN with residual add + ReLU fused into its epilogue
    return conv1d_bn(h1, p['w2'], p['b2'], stride=1, relu=True, shortcut=s)


# --------------------------------------------------------------------------
# Matmul + bias (bf16 out, full M tiles) — used for the LSTM input projections
# --------------------------------------------------------------------------

def _mm_bias_kernel(a_ref, w_ref, bias_ref, o_ref):
    acc = jnp.dot(a_ref[...], w_ref[...], preferred_element_type=jnp.float32)
    o_ref[...] = (acc + bias_ref[...]).astype(o_ref.dtype)


def matmul_bias(a, w, bias, out_dtype=jnp.bfloat16, tm=512):
    """out = a @ w + bias; bf16 operands, f32 accumulation, bf16 output.
    M rounded up to a full tile multiple (unmasked lane/sublane-dense stores)."""
    M, K = a.shape
    K2, N = w.shape
    assert K == K2
    Np = _round_up(N, 128)
    tm = min(tm, _round_up(M, 8))
    Mp = _round_up(M, tm)

    a_p = jnp.pad(a.astype(jnp.bfloat16), ((0, Mp - M), (0, 0)))
    w_p = jnp.pad(w.astype(jnp.bfloat16), ((0, 0), (0, Np - N)))
    bias_p = jnp.pad(bias.astype(jnp.float32), (0, Np - N)).reshape(1, Np)

    out = pl.pallas_call(
        _mm_bias_kernel,
        out_shape=jax.ShapeDtypeStruct((Mp, Np), out_dtype),
        grid=(Mp // tm,),
        in_specs=[pl.BlockSpec((tm, K), lambda i: (i, 0)),
                  pl.BlockSpec((K, Np), lambda i: (0, 0)),
                  pl.BlockSpec((1, Np), lambda i: (0, 0))],
        out_specs=pl.BlockSpec((tm, Np), lambda i: (i, 0)),
        compiler_params=pltpu.CompilerParams(
            dimension_semantics=("parallel",),
            vmem_limit_bytes=_VMEM_LIMIT),
    )(a_p, w_p, bias_p)
    return out[:M, :N]


# --------------------------------------------------------------------------
# Fused MLP: Linear(512,2048)+ReLU(+Dropout eval) + Linear(2048,41)
# --------------------------------------------------------------------------

def _mlp_kernel(a_ref, w1_ref, b1_ref, w2_ref, b2_ref, o_ref):
    z = jnp.dot(a_ref[...], w1_ref[...], preferred_element_type=jnp.float32)
    z = jnp.maximum(z + b1_ref[...], 0.0)
    acc = jnp.dot(z.astype(jnp.bfloat16), w2_ref[...],
                  preferred_element_type=jnp.float32)
    o_ref[...] = (acc + b2_ref[...]).astype(o_ref.dtype)


def mlp_fused(a, w1, b1, w2, b2, tm=256):
    """relu(a@w1+b1) @ w2 + b2 fused per M tile (no HBM round-trip of the
    2048-wide intermediate); fc2 output padded to 128 lanes, sliced back."""
    M, K1 = a.shape
    _, N1 = w1.shape
    _, N2 = w2.shape
    N2p = _round_up(N2, 128)
    tm = min(tm, _round_up(M, 8))
    Mp = _round_up(M, tm)

    a_p = jnp.pad(a.astype(jnp.bfloat16), ((0, Mp - M), (0, 0)))
    w1b = w1.astype(jnp.bfloat16)
    b1r = b1.astype(jnp.float32).reshape(1, N1)
    w2p = jnp.pad(w2.astype(jnp.bfloat16), ((0, 0), (0, N2p - N2)))
    b2r = jnp.pad(b2.astype(jnp.float32), (0, N2p - N2)).reshape(1, N2p)

    out = pl.pallas_call(
        _mlp_kernel,
        out_shape=jax.ShapeDtypeStruct((Mp, N2p), jnp.float32),
        grid=(Mp // tm,),
        in_specs=[
            pl.BlockSpec((tm, K1), lambda i: (i, 0)),
            pl.BlockSpec((K1, N1), lambda i: (0, 0)),
            pl.BlockSpec((1, N1), lambda i: (0, 0)),
            pl.BlockSpec((N1, N2p), lambda i: (0, 0)),
            pl.BlockSpec((1, N2p), lambda i: (0, 0)),
        ],
        out_specs=pl.BlockSpec((tm, N2p), lambda i: (i, 0)),
        compiler_params=pltpu.CompilerParams(
            dimension_semantics=("parallel",),
            vmem_limit_bytes=_VMEM_LIMIT),
    )(a_p, w1b, b1r, w2p, b2r)
    return out[:M, :N2]


# --------------------------------------------------------------------------
# Streamed bidirectional LSTM recurrence
# grid = (direction, time-chunk); dirs split across TensorCores on v7x.
# --------------------------------------------------------------------------

def _lstm_kernel(xproj_ref, whh_ref, len_ref, hs_ref, h_sc, c_sc):
    """One (direction, time-chunk) grid step of the BiLSTM recurrence.

    xproj_ref: (Tc, Bp, 4H) bf16  x_t @ W_ih^T + b_ih + b_hh for this direction
    whh_ref:   (H, 4H)      bf16  W_hh^T for this direction
    len_ref:   (Bp, 1)      int32 valid length per (padded) batch row
    hs_ref:    (Tc, Bp, H)  bf16  hidden states out (original time order)
    h_sc/c_sc: (Bp, H)      f32   recurrent state, persists across time chunks
    Gate order follows PyTorch: [i, f, g, o].

    Direction d=1 walks original time backwards (chunk and in-chunk indices
    are arithmetically reversed); the state is zeroed while t >= length, so
    the backward pass starts from zero state at t=len-1 (pack semantics) and
    all padded positions come out as exact zeros.
    """
    d = pl.program_id(0)
    ci = pl.program_id(1)
    n_chunks = pl.num_programs(1)
    Tc, _, H = hs_ref.shape

    @pl.when(ci == 0)
    def _():
        h_sc[...] = jnp.zeros_like(h_sc)
        c_sc[...] = jnp.zeros_like(c_sc)

    # Original-time chunk handled by this grid step (reversed for d=1).
    base = (ci + d * (n_chunks - 1 - 2 * ci)) * Tc
    lens = len_ref[...]                                    # (Bp, 1) int32

    def step(s, carry):
        t = s + d * (Tc - 1 - 2 * s)                       # in-chunk time index
        gates = xproj_ref[t].astype(jnp.float32) + jnp.dot(
            h_sc[...].astype(jnp.bfloat16), whh_ref[...],
            preferred_element_type=jnp.float32)            # (Bp, 4H) f32
        i_g = 0.5 * (jnp.tanh(0.5 * gates[:, 0 * H:1 * H]) + 1.0)
        f_g = 0.5 * (jnp.tanh(0.5 * gates[:, 1 * H:2 * H]) + 1.0)
        g_g = jnp.tanh(gates[:, 2 * H:3 * H])
        o_g = 0.5 * (jnp.tanh(0.5 * gates[:, 3 * H:4 * H]) + 1.0)
        c_new = f_g * c_sc[...] + i_g * g_g
        h_new = o_g * jnp.tanh(c_new)
        valid = (base + t) < lens                          # (Bp, 1) bool
        c_sc[...] = jnp.where(valid, c_new, 0.0)
        h_gated = jnp.where(valid, h_new, 0.0)
        h_sc[...] = h_gated
        hs_ref[t] = h_gated.astype(jnp.bfloat16)
        return carry

    lax.fori_loop(0, Tc, step, 0)


def lstm_recurrence(xproj, whh, lengths, Tc):
    """xproj: (2, T_pad, Bp, 4H) bf16; whh: (2, H, 4H) bf16;
    lengths: (Bp, 1) int32  ->  hidden states (2, T_pad, Bp, H) bf16."""
    _, T_pad, Bp, G = xproj.shape
    H = G // 4
    n_chunks = T_pad // Tc

    def t_map(d, i):  # time-chunk block index, arithmetically reversed for d=1
        return (d, i + d * (n_chunks - 1 - 2 * i), 0, 0)

    return pl.pallas_call(
        _lstm_kernel,
        out_shape=jax.ShapeDtypeStruct((2, T_pad, Bp, H), jnp.bfloat16),
        grid=(2, n_chunks),
        in_specs=[
            pl.BlockSpec((None, Tc, Bp, G), t_map),
            pl.BlockSpec((None, H, G), lambda d, i: (d, 0, 0)),
            pl.BlockSpec((Bp, 1), lambda d, i: (0, 0)),
        ],
        out_specs=pl.BlockSpec((None, Tc, Bp, H), t_map),
        scratch_shapes=[pltpu.VMEM((Bp, H), jnp.float32),   # h state
                        pltpu.VMEM((Bp, H), jnp.float32)],  # c state
        compiler_params=pltpu.CompilerParams(
            dimension_semantics=("parallel", "arbitrary"),  # dirs // cores on v7x
            vmem_limit_bytes=_VMEM_LIMIT),
    )(xproj, whh, lengths)


def run_lstm_layer(ht, layer, lengths, Tc):
    """One bidirectional LSTM layer.  ht: (T_pad, Bp, Din) bf16
    -> (T_pad, Bp, 2H) bf16 (exact zeros at padded/invalid positions)."""
    T_pad, Bp, Din = ht.shape
    H = layer['fwd']['w_hh_t'].shape[0]
    rows = ht.reshape(T_pad * Bp, Din)
    xf = matmul_bias(rows, layer['fwd']['w_ih_t'], layer['fwd']['bias'])
    xb = matmul_bias(rows, layer['bwd']['w_ih_t'], layer['bwd']['bias'])
    xs = jnp.stack([xf.reshape(T_pad, Bp, 4 * H),
                    xb.reshape(T_pad, Bp, 4 * H)], axis=0)      # (2,T,Bp,4H) bf16
    whh = jnp.stack([layer['fwd']['w_hh_t'], layer['bwd']['w_hh_t']],
                    axis=0).astype(jnp.bfloat16)                # (2, H, 4H)
    hs = lstm_recurrence(xs, whh, lengths, Tc)                  # (2,T,Bp,H) bf16
    return jnp.concatenate([hs[0], hs[1]], axis=-1)             # (T,Bp,2H)


# --------------------------------------------------------------------------
# Full forward pass
# --------------------------------------------------------------------------

def model4noisy_forward(params, x, seq_lengths):
    """x: (B, T, 13) float32; seq_lengths: static python ints (eval forward)."""
    # GaussianNoise only applies in training; eval mode => identity.
    # TODO(synk): training-mode GaussianNoise / Dropout use torch RNG and are
    # intentionally not reproduced; this is the eval-mode forward pass.
    dl = [(l - 3) // 2 + 1 for l in seq_lengths]   # Model4's length bookkeeping

    # EmbeddingLayer1: ResidualBlock1D(13,32,3)(32,64,3)(64,128,3)(128,256,3,s=2)
    h = x
    for blk, stride in zip(params['blocks'], (1, 1, 1, 2)):
        h = res_block(h, blk, stride)              # (B, T2, 256) bf16

    B = x.shape[0]
    H = 256
    Tmax = max(dl)
    Bp = _round_up(B, 8)

    # Time-chunk size for the streamed recurrence (per-direction block bytes).
    step_bytes = Bp * (4 * H + H) * 2              # bf16 xproj row + bf16 hs row
    Tc = int(max(1, min(Tmax, _LSTM_CHUNK_BYTES // step_bytes)))
    T_pad = _round_up(Tmax, Tc)

    # pack_padded_sequence emulation: go time-major, pad batch to sublanes and
    # time to the chunk multiple; validity enforced inside the recurrence.
    ht = jnp.transpose(h[:, :Tmax, :], (1, 0, 2)).astype(jnp.bfloat16)
    ht = jnp.pad(ht, ((0, T_pad - Tmax), (0, Bp - B), (0, 0)))
    lengths = jnp.pad(jnp.asarray(dl, dtype=jnp.int32), (0, Bp - B)).reshape(Bp, 1)

    # 4-layer bidirectional LSTM, hidden 256 (dropout inactive in eval).
    for layer in params['lstm']:
        ht = run_lstm_layer(ht, layer, lengths, Tc)        # (T_pad, Bp, 512)

    # ht is exactly 0 at padded positions == pad_packed_sequence output.
    # MLP: Linear(512,2048)+ReLU+Dropout(eval)+Linear(2048,41), fused.
    z = mlp_fused(ht.reshape(T_pad * Bp, 2 * H), params['fc1_w'], params['fc1_b'],
                  params['fc2_w'], params['fc2_b'])
    z = z.reshape(T_pad, Bp, 41)[:Tmax, :B]
    return jnp.transpose(z, (1, 0, 2)), dl


# --------------------------------------------------------------------------
# Deterministic synthetic parameter initialization (BN folded, eval stats)
# --------------------------------------------------------------------------

class KeyGen:
    def __init__(self, seed):
        self.key = jax.random.PRNGKey(seed)

    def __call__(self):
        self.key, sub = jax.random.split(self.key)
        return sub


def fold_bn(w, b, gamma, beta, mean, var, eps=1e-5):
    s = gamma / jnp.sqrt(var + eps)
    return w * s[:, None, None], (b - mean) * s + beta


def init_conv_bn(kg, cin, cout, k):
    fan = cin * k
    w = jax.random.normal(kg(), (cout, cin, k), jnp.float32) / jnp.sqrt(float(fan))
    b = 0.01 * jax.random.normal(kg(), (cout,), jnp.float32)
    gamma = 1.0 + 0.1 * jax.random.normal(kg(), (cout,), jnp.float32)
    beta = 0.01 * jax.random.normal(kg(), (cout,), jnp.float32)
    mean = jnp.zeros((cout,), jnp.float32)     # eval running stats
    var = jnp.ones((cout,), jnp.float32)
    return fold_bn(w, b, gamma, beta, mean, var)


def init_res_block(kg, cin, cout, k):
    w1, b1 = init_conv_bn(kg, cin, cout, k)
    w2, b2 = init_conv_bn(kg, cout, cout, k)
    ws, bs = init_conv_bn(kg, cin, cout, 1)    # cin != cout => conv shortcut
    return dict(w1=w1, b1=b1, w2=w2, b2=b2, ws=ws, bs=bs)


def init_lstm_dir(kg, din, H):
    s = 1.0 / jnp.sqrt(float(H))
    w_ih = s * jax.random.normal(kg(), (4 * H, din), jnp.float32)
    w_hh = s * jax.random.normal(kg(), (4 * H, H), jnp.float32)
    b_ih = s * jax.random.normal(kg(), (4 * H,), jnp.float32)
    b_hh = s * jax.random.normal(kg(), (4 * H,), jnp.float32)
    return dict(w_ih_t=w_ih.T, w_hh_t=w_hh.T, bias=b_ih + b_hh)


def init_params(kg):
    blocks = [init_res_block(kg, 13, 32, 3),
              init_res_block(kg, 32, 64, 3),
              init_res_block(kg, 64, 128, 3),
              init_res_block(kg, 128, 256, 3)]
    H = 256
    lstm, din = [], 256
    for _ in range(4):
        lstm.append(dict(fwd=init_lstm_dir(kg, din, H),
                         bwd=init_lstm_dir(kg, din, H)))
        din = 2 * H
    fc1_w = jax.random.normal(kg(), (512, 2048), jnp.float32) / jnp.sqrt(512.0)
    fc1_b = 0.01 * jax.random.normal(kg(), (2048,), jnp.float32)
    fc2_w = jax.random.normal(kg(), (2048, 41), jnp.float32) / jnp.sqrt(2048.0)
    fc2_b = 0.01 * jax.random.normal(kg(), (41,), jnp.float32)
    return dict(blocks=blocks, lstm=lstm,
                fc1_w=fc1_w, fc1_b=fc1_b, fc2_w=fc2_w, fc2_b=fc2_b)


# --------------------------------------------------------------------------

if __name__ == "__main__":
    params = init_params(KeyGen(42))

    B, T = 2, 16
    x = jax.random.normal(jax.random.PRNGKey(0), (B, T, 13), jnp.float32)
    seq_lengths = [16, 13]

    out, dl = model4noisy_forward(params, x, seq_lengths)
    out = jax.block_until_ready(out)

    assert out.shape == (B, max(dl), 41), out.shape
    assert dl == [(l - 3) // 2 + 1 for l in seq_lengths]
    assert bool(jnp.all(jnp.isfinite(out)))
    print("KERNEL_OK")
</pallas_src>

<mosaic_0001>
module attributes {stable_mosaic.version = 11 : i64} {
  func.func @_conv_kernel(%arg0: i32, %arg1: memref<1x18x13xbf16, #tpu.memory_space<vmem>>, %arg2: memref<3x13x128xbf16, #tpu.memory_space<vmem>>, %arg3: memref<1x128xf32, #tpu.memory_space<vmem>>, %arg4: memref<1x16x128xbf16, #tpu.memory_space<vmem>>) attributes {dimension_semantics = [#tpu.dimension_semantics<parallel>], iteration_bounds = array<i64: 2>, scalar_prefetch = 0 : i64, scratch_operands = 0 : i64, tpu.core_type = #tpu.core_type<tc>, window_params = [{transform_indices = @transform_0, window_bounds = array<i64: 1, 18, 13>}, {pipeline_mode = #tpu.pipeline_mode<synchronous>, transform_indices = @transform_1, window_bounds = array<i64: 3, 13, 128>}, {pipeline_mode = #tpu.pipeline_mode<synchronous>, transform_indices = @transform_2, window_bounds = array<i64: 1, 128>}, {transform_indices = @transform_3, window_bounds = array<i64: 1, 16, 128>}]} {
    %cst = arith.constant 0.000000e+00 : f32
    %0 = vector.broadcast %cst : f32 to vector<16x128xf32>
    %c0 = arith.constant 0 : index
    %c0_0 = arith.constant 0 : index
    %c0_1 = arith.constant 0 : index
    %1 = vector.load %arg1[%c0, %c0_0, %c0_1] : memref<1x18x13xbf16, #tpu.memory_space<vmem>>, vector<1x16x13xbf16>
    %2 = vector.shape_cast %1 : vector<1x16x13xbf16> to vector<16x13xbf16>
    %c0_2 = arith.constant 0 : index
    %c0_3 = arith.constant 0 : index
    %c0_4 = arith.constant 0 : index
    %3 = vector.load %arg2[%c0_2, %c0_3, %c0_4] : memref<3x13x128xbf16, #tpu.memory_space<vmem>>, vector<1x13x128xbf16>
    %4 = vector.shape_cast %3 : vector<1x13x128xbf16> to vector<13x128xbf16>
    %cst_5 = arith.constant dense<0.000000e+00> : vector<16x128xf32>
    %5 = tpu.matmul %2, %4, %cst_5 {dimension_numbers = #tpu.dot_dimension_numbers<[1], [0], [0], [1], [0, 0, 1, 1], [], []>} : vector<16x13xbf16>, vector<13x128xbf16>, vector<16x128xf32> -> vector<16x128xf32>
    %6 = arith.addf %0, %5 : vector<16x128xf32>
    %c0_6 = arith.constant 0 : index
    %c1 = arith.constant 1 : index
    %c0_7 = arith.constant 0 : index
    %7 = vector.load %arg1[%c0_6, %c1, %c0_7] : memref<1x18x13xbf16, #tpu.memory_space<vmem>>, vector<1x16x13xbf16>
    %8 = vector.shape_cast %7 : vector<1x16x13xbf16> to vector<16x13xbf16>
    %c1_8 = arith.constant 1 : index
    %c0_9 = arith.constant 0 : index
    %c0_10 = arith.constant 0 : index
    %9 = vector.load %arg2[%c1_8, %c0_9, %c0_10] : memref<3x13x128xbf16, #tpu.memory_space<vmem>>, vector<1x13x128xbf16>
    %10 = vector.shape_cast %9 : vector<1x13x128xbf16> to vector<13x128xbf16>
    %cst_11 = arith.constant dense<0.000000e+00> : vector<16x128xf32>
    %11 = tpu.matmul %8, %10, %cst_11 {dimension_numbers = #tpu.dot_dimension_numbers<[1], [0], [0], [1], [0, 0, 1, 1], [], []>} : vector<16x13xbf16>, vector<13x128xbf16>, vector<16x128xf32> -> vector<16x128xf32>
    %12 = arith.addf %6, %11 : vector<16x128xf32>
    %c0_12 = arith.constant 0 : index
    %c2 = arith.constant 2 : index
    %c0_13 = arith.constant 0 : index
    %13 = vector.load %arg1[%c0_12, %c2, %c0_13] : memref<1x18x13xbf16, #tpu.memory_space<vmem>>, vector<1x16x13xbf16>
    %14 = vector.shape_cast %13 : vector<1x16x13xbf16> to vector<16x13xbf16>
    %c2_14 = arith.constant 2 : index
    %c0_15 = arith.constant 0 : index
    %c0_16 = arith.constant 0 : index
    %15 = vector.load %arg2[%c2_14, %c0_15, %c0_16] : memref<3x13x128xbf16, #tpu.memory_space<vmem>>, vector<1x13x128xbf16>
    %16 = vector.shape_cast %15 : vector<1x13x128xbf16> to vector<13x128xbf16>
    %cst_17 = arith.constant dense<0.000000e+00> : vector<16x128xf32>
    %17 = tpu.matmul %14, %16, %cst_17 {dimension_numbers = #tpu.dot_dimension_numbers<[1], [0], [0], [1], [0, 0, 1, 1], [], []>} : vector<16x13xbf16>, vector<13x128xbf16>, vector<16x128xf32> -> vector<16x128xf32>
    %18 = arith.addf %12, %17 : vector<16x128xf32>
    %c0_18 = arith.constant 0 : index
    %c0_19 = arith.constant 0 : index
    %19 = vector.load %arg3[%c0_18, %c0_19] : memref<1x128xf32, #tpu.memory_space<vmem>>, vector<1x128xf32>
    %20 = vector.broadcast %19 : vector<1x128xf32> to vector<16x128xf32>
    %21 = arith.addf %18, %20 : vector<16x128xf32>
    %cst_20 = arith.constant 0.000000e+00 : f32
    %22 = vector.broadcast %cst_20 : f32 to vector<16x128xf32>
    %23 = arith.maximumf %21, %22 : vector<16x128xf32>
    %24 = arith.truncf %23 : vector<16x128xf32> to vector<16x128xbf16>
    %c0_21 = arith.constant 0 : index
    %c0_22 = arith.constant 0 : index
    %c0_23 = arith.constant 0 : index
    %25 = vector.load %arg4[%c0_21, %c0_22, %c0_23] : memref<1x16x128xbf16, #tpu.memory_space<vmem>>, vector<1x16x128xbf16>
    %26 = vector.shape_cast %25 : vector<1x16x128xbf16> to vector<16x128xbf16>
    %27 = vector.shape_cast %24 : vector<16x128xbf16> to vector<1x16x128xbf16>
    tpu.vector_store %arg4[%c0_21, %c0_22, %c0_23], %27 {strides = array<i32>} : memref<1x16x128xbf16, #tpu.memory_space<vmem>>, vector<1x16x128xbf16>,
    return
  }
  func.func @transform_0(%arg0: i32) -> (i32, i32, i32) {
    %c0_i32 = arith.constant 0 : i32
    %c0_i32_0 = arith.constant 0 : i32
    %c0_i32_1 = arith.constant 0 : i32
    return %arg0, %c0_i32, %c0_i32_0 : i32, i32, i32
  }
  func.func @transform_1(%arg0: i32) -> (i32, i32, i32) {
    %c0_i32 = arith.constant 0 : i32
    %c0_i32_0 = arith.constant 0 : i32
    %c0_i32_1 = arith.constant 0 : i32
    %c0_i32_2 = arith.constant 0 : i32
    return %c0_i32, %c0_i32_0, %c0_i32_1 : i32, i32, i32
  }
  func.func @transform_2(%arg0: i32) -> (i32, i32) {
    %c0_i32 = arith.constant 0 : i32
    %c0_i32_0 = arith.constant 0 : i32
    %c0_i32_1 = arith.constant 0 : i32
    return %c0_i32, %c0_i32_0 : i32, i32
  }
  func.func @transform_3(%arg0: i32) -> (i32, i32, i32) {
    %c0_i32 = arith.constant 0 : i32
    %c0_i32_0 = arith.constant 0 : i32
    %c0_i32_1 = arith.constant 0 : i32
    return %arg0, %c0_i32, %c0_i32_0 : i32, i32, i32
  }
}

</mosaic_0001>

<llo_original>
// kernel: tpu_custom_call.1
$region0: #{tpu_custom_call.1}
  #allocation0 [shape = 'u32[]', space=smem, size = 0x4, offset = 0x4, fixed_abs, tag = 'smem constant byte address 0x4 - core index']
  #allocation1 [shape = 'u32[144,128]{1,0:T(1,128)}', space=vmem, size = 0x12000, scoped, tag = 'internal scratch']
  %s0 = inlined_call_operand.vmem [shape: bf16[2,18,13], index: 0, kind: input, shape index: {}]
  %s1 = inlined_call_operand.vmem [shape: bf16[3,13,128], index: 1, kind: input, shape index: {}]
  %s2 = inlined_call_operand.vmem [shape: f32[1,128], index: 2, kind: input, shape index: {}]
  %s3 = inlined_call_operand.hbm [shape: bf16[2,16,128], index: 3, kind: output, shape index: {}]
  %s4 = sld [smem:[#allocation0]]
  $region45: #{tpu_custom_call.1} parent=0
    _
  %s6 = ssub.s32 1, %s4
  %s7 = scalar_select 0, %s6, %s4
  $region1: #{tpu_custom_call.1} parent=0
    #allocation2 [shape = 'u8[8192]{0}', space=vmem, size = 0x2000, scoped, tag = 'output window, operand 0']
    #allocation3 [shape = 's32[2]{0}', space=sflag, size = 0x8, scoped, tag = 'scoped memory for tpu_custom_call.1']
    %8 = vsyncpa [#allocation3], 0
    %s9 = scalar_lea.sflag [#allocation3], 1
    %10 = vsyncpa %s9, 0
    loop: start=0, step=1, limit=4
    $region2: #{tpu_custom_call.1} parent=1 // loop_pre_header
      _
    $region3: #{tpu_custom_call.1} parent=1 // loop_header
      %s12 = sphi 0, %s16
      %p13 = scmp.ge.s32.totalorder %s12, 4
      %s22 = sphi 0, %s24
      %s25 = sphi 0, %s22
      %s26 = sphi 0, %s25
      %s42 = sphi 0, %s26
      %s46 = sphi 0, %s46
      %s48 = sphi 0, %s46
      %s49 = sphi 0, %s48
      %s63 = sphi 0, %s49
      %s67 = sphi 0, %s67
      %s69 = sphi 0, %s67
      %s70 = sphi 0, %s69
      %s84 = sphi 0, %s70
      %s90 = sphi 0, %s92
      %s93 = sphi 0, %s90
      %s94 = sphi 0, %s93
      %s110 = sphi 0, %s94
    $region4: #{tpu_custom_call.1} parent=1 // loop_header_branch
      %15 = sbr.rel (%p13) target = $region8
    $region5: #{tpu_custom_call.1} parent=1 // loop_body
      %s17 = ssub.s32 %s12, 1
      %s18 = ssub.s32 %s12, 2
      %s19 = sadd.s32 %s12, 1
      %s20 = ssub.s32 %s12, %s19
      %p21 = scmp.eq.s32.totalorder %s20, 0
      %s23 = sadd.s32 %s22, 1
      %s24 = scalar_select %p21, %s22, %s23
      %p27 = pneg %p21
      %p28 = scmp.eq.s32.totalorder %s12, 1
      %p29 = por %p27, %p28
      %p30 = scmp.ne.s32.totalorder %s22, %s25
      %p31 = scmp.eq.s32.totalorder %s12, 0
      %p32 = por %p30, %p31
      %p33 = scmp.ne.s32.totalorder %s22, %s25
      %p34 = scmp.eq.s32.totalorder %s17, 1
      %p35 = por %p33, %p34
      %p36 = scmp.ne.s32.totalorder %s25, %s26
      %p37 = scmp.eq.s32.totalorder %s17, 0
      %p38 = por %p36, %p37
      %p39 = scmp.ne.s32.totalorder %s25, %s26
      %p40 = scmp.eq.s32.totalorder %s18, 1
      %p41 = por %p39, %p40
      %p43 = scmp.ne.s32.totalorder %s26, %s42
      %p44 = scmp.eq.s32.totalorder %s18, 0
      %p45 = por %p43, %p44
      %s47 = sadd.s32 %s46, 1
      %p50 = scmp.eq.s32.totalorder %s12, 1
      %p51 = scmp.ne.s32.totalorder %s46, %s48
      %p52 = scmp.eq.s32.totalorder %s12, 0
      %p53 = por %p51, %p52
      %p54 = scmp.ne.s32.totalorder %s46, %s48
      %p55 = scmp.eq.s32.totalorder %s17, 1
      %p56 = por %p54, %p55
      %p57 = scmp.ne.s32.totalorder %s48, %s49
      %p58 = scmp.eq.s32.totalorder %s17, 0
      %p59 = por %p57, %p58
      %p60 = scmp.ne.s32.totalorder %s48, %s49
      %p61 = scmp.eq.s32.totalorder %s18, 1
      %p62 = por %p60, %p61
      %p64 = scmp.ne.s32.totalorder %s49, %s63
      %p65 = scmp.eq.s32.totalorder %s18, 0
      %p66 = por %p64, %p65
      %s68 = sadd.s32 %s67, 1
      %p71 = scmp.eq.s32.totalorder %s12, 1
      %p72 = scmp.ne.s32.totalorder %s67, %s69
      %p73 = scmp.eq.s32.totalorder %s12, 0
      %p74 = por %p72, %p73
      %p75 = scmp.ne.s32.totalorder %s67, %s69
      %p76 = scmp.eq.s32.totalorder %s17, 1
      %p77 = por %p75, %p76
      %p78 = scmp.ne.s32.totalorder %s69, %s70
      %p79 = scmp.eq.s32.totalorder %s17, 0
      %p80 = por %p78, %p79
      %p81 = scmp.ne.s32.totalorder %s69, %s70
      %p82 = scmp.eq.s32.totalorder %s18, 1
      %p83 = por %p81, %p82
      %p85 = scmp.ne.s32.totalorder %s70, %s84
      %p86 = scmp.eq.s32.totalorder %s18, 0
      %p87 = por %p85, %p86
      %s88 = ssub.s32 %s12, %s19
      %p89 = scmp.eq.s32.totalorder %s88, 0
      %s91 = sadd.s32 %s90, 1
      %s92 = scalar_select %p89, %s90, %s91
      %p95 = pneg %p89
      %p96 = scmp.eq.s32.totalorder %s12, 1
      %p97 = por %p95, %p96
      %p98 = scmp.ne.s32.totalorder %s90, %s93
      %p99 = scmp.eq.s32.totalorder %s12, 0
      %p100 = por %p98, %p99
      %p101 = scmp.ne.s32.totalorder %s90, %s93
      %p102 = scmp.eq.s32.totalorder %s17, 1
      %p103 = por %p101, %p102
      %p104 = scmp.ne.s32.totalorder %s93, %s94
      %p105 = scmp.eq.s32.totalorder %s17, 0
      %p106 = por %p104, %p105
      %p107 = scmp.ne.s32.totalorder %s93, %s94
      %p108 = scmp.eq.s32.totalorder %s18, 1
      %p109 = por %p107, %p108
      %p111 = scmp.ne.s32.totalorder %s94, %s110
      %p112 = scmp.eq.s32.totalorder %s18, 0
      %p113 = por %p111, %p112
      %p114 = scmp.le.s32.totalorder 1, %s12
      %p115 = scmp.lt.s32.totalorder %s12, 3
      %p116 = pnand %p114, %p115
      %p117 = pneg %p116
      // Predicated region
      $region9: #{tpu_custom_call.1} parent=5 // pred_check
        _
      $region10: #{tpu_custom_call.1} parent=5 // pred_check_branch
        %119 = sbr.rel (%p116) target = $region12
      $region11: #{tpu_custom_call.1} parent=5 // pred_region
        %s120 = ssub.s32 %s12, 1
        // Predicated region
        $region13: #{tpu_custom_call.1} parent=11 // pred_check
          %p121 = pneg %p59
        $region14: #{tpu_custom_call.1} parent=11 // pred_check_branch
          %123 = sbr.rel (%p121) target = $region16
        $region15: #{tpu_custom_call.1} parent=11 // pred_region
          _
        $region16: #{tpu_custom_call.1} parent=11 // pred_fallthru
          _
        // Predicated region
        $region17: #{tpu_custom_call.1} parent=11 // pred_check
          %p124 = pneg %p80
        $region18: #{tpu_custom_call.1} parent=11 // pred_check_branch
          %126 = sbr.rel (%p124) target = $region20
        $region19: #{tpu_custom_call.1} parent=11 // pred_region
          _
        $region20: #{tpu_custom_call.1} parent=11 // pred_fallthru
          _
      $region12: #{tpu_custom_call.1} parent=5 // pred_fallthru
        _
      %p127 = scmp.lt.s32.totalorder %s12, 2
      // Predicated region
      $region21: #{tpu_custom_call.1} parent=5 // pred_check
        %p128 = pneg %p127
      $region22: #{tpu_custom_call.1} parent=5 // pred_check_branch
        %130 = sbr.rel (%p128) target = $region24
      $region23: #{tpu_custom_call.1} parent=5 // pred_region
        // Predicated region
        $region25: #{tpu_custom_call.1} parent=23 // pred_check
          %p131 = pneg %p32
        $region26: #{tpu_custom_call.1} parent=23 // pred_check_branch
          %133 = sbr.rel (%p131) target = $region28
        $region27: #{tpu_custom_call.1} parent=23 // pred_region
          %p134 = scmp.lt.s32.totalorder %s12, 1
          %s135 = scalar_select %p134, %s12, 1
          %s136 = smul.addr %s135, 3
          %s137 = smul.addr %s136, 4
          %s138 = scalar_lea.vmem %s0, %s137
        $region28: #{tpu_custom_call.1} parent=23 // pred_fallthru
          _
      $region24: #{tpu_custom_call.1} parent=5 // pred_fallthru
        _
      %p139 = scmp.le.s32.totalorder 1, %s12
      %p140 = scmp.lt.s32.totalorder %s12, 3
      %p141 = pnand %p139, %p140
      %p142 = pneg %p141
      // Predicated region
      $region29: #{tpu_custom_call.1} parent=5 // pred_check
        _
      $region30: #{tpu_custom_call.1} parent=5 // pred_check_branch
        %144 = sbr.rel (%p141) target = $region32
      $region31: #{tpu_custom_call.1} parent=5 // pred_region
        %s145 = ssub.s32 %s12, 1
        %p146 = scmp.lt.s32.totalorder %s17, 1
        %s147 = scalar_select %p146, %s17, 1
        %s148 = smul.addr %s147, 3
        %s149 = smul.addr %s148, 4
        %s150 = scalar_lea.vmem %s0, %s149
        %p151 = pneg %p38
        %p152 = pneg %p35
        %p153 = pneg %p59
        %p154 = pneg %p56
        %p155 = pneg %p80
        %p156 = pneg %p77
        %p157 = pneg %p106
        %p158 = pneg %p103
        %s159 = sand.u32 %s93, 1
        %s160 = scalar_lea.sflag [#allocation3], %s159
        %s161 = sand.u32 %s93, 1
        %s162 = smul.addr %s161, 8
        %s163 = scalar_lea.vmem [#allocation2], %s162
        %p164 = scmp.lt.s32.totalorder %s17, 1
        %s165 = scalar_select %p164, %s17, 1
        %s166 = smul.addr %s165, 3
        %s167 = smul.addr %s166, 4
        %s168 = scalar_lea.vmem %s0, %s167
        %v170 = vld [vmem:[%s168] sm:$0xf]
        %v171 = vld [vmem:[%s168 + $0x4] sm:$0xf]
        %v172 = vld [vmem:[%s1] sm:$0xf]
        %v173 = vld [vmem:[%s1 + $0x4] sm:$0x7]
        %v174 = vld [vmem:[%s168 + $0x8] sm:$0x1]
        %s175 = scalar_lea.vmem %s1, 8
        %v176 = vld [vmem:[%s175] sm:$0xf]
        %v177 = vld [vmem:[%s175 + $0x4] sm:$0x7]
        %v181 = vunpack.c.l.b16 %v170
        %v182 = vunpack.c.l.b16 %v171
        %v183 = vunpack.c.l.b16 %v174
        %v184 = vpack.c.b16 %v182, %v181
        %v185 = vpack.c.b16 %v183, %v183
        %vm186 = vsmask.f32 7424
        %v188 = vshrl.u32 %v184, 16
        %v190 = vshll.u32 %v184, 16
        %v192 = vrot.slane %v190, 1
        %v193 = vor.u32 %v188, %v192
        %v195 = vshll.u32 %v185, 16
        %v197 = vrot.slane %v195, 1
        %v198 = vsel %vm186, %v193, %v197
        %v201 = vunpack.c.l.b16 %v176
        %v202 = vunpack.c.l.b16 %v177
        %v203 = vpack.c.b16 %v202, %v201
        %vm204 = vcmask 105472
        %v206 = vsel %vm204, %v198, 0
        %vm208 = vcmask 1045504
        %vm209 = vcmask 1046528
        %v210 = vsel %vm208, 4294967295, 65535
        %v211 = vsel %vm209, %v210, 0
        %v213 = vand.u32 %v203, %v211
        %215 = vmatprep.subr.bf16.mxu0 0
        %216 = vmatpush1.bf16.msra.mxu0 %v213
        %217 = vmatprep.subr.bf16.mxu0 0
        %218 = vmatpush1.bf16.msra.mxu0 0
        %219 = vmatprep.subr.bf16.mxu0 0
        %220 = vmatpush1.bf16.msra.mxu0 0
        %221 = vmatprep.subr.bf16.mxu0 0
        %222 = vmatpush1.bf16.msra.mxu0 0
        %223 = vmatprep.subr.bf16.mxu0 0
        %224 = vmatpush1.bf16.msra.mxu0 0
        %225 = vmatprep.subr.bf16.mxu0 0
        %226 = vmatpush1.bf16.msra.mxu0 0
        %227 = vmatprep.subr.bf16.mxu0 0
        %228 = vmatpush1.bf16.msra.mxu0 0
        %229 = vmatprep.subr.bf16.mxu0 0
        %230 = vmatpush1.bf16.msra.mxu0 0
        %231 = vmatprep.subr.bf16.mxu0 0
        %232 = vmatpush1.bf16.msra.mxu0 0
        %233 = vmatprep.subr.bf16.mxu0 0
        %234 = vmatpush1.bf16.msra.mxu0 0
        %235 = vmatprep.subr.bf16.mxu0 0
        %236 = vmatpush1.bf16.msra.mxu0 0
        %237 = vmatprep.subr.bf16.mxu0 0
        %238 = vmatpush1.bf16.msra.mxu0 0
        %239 = vmatprep.subr.bf16.mxu0 0
        %240 = vmatpush1.bf16.msra.mxu0 0
        %241 = vmatprep.subr.bf16.mxu0 0
        %242 = vmatpush1.bf16.msra.mxu0 0
        %243 = vmatprep.subr.bf16.mxu0 0
        %244 = vmatpush1.bf16.msra.mxu0 0
        %245 = vmatprep.subr.bf16.mxu0 0
        %246 = vmatpush1.bf16.msra.mxu0 0
        %247 = vmatprep.mubr.bf16.mxu0 0
        %248 = vmatmul.mubr.bf16.gmra.mrb[0].mxu0 %v206
        %v249 = vpop.f32.mrb[0].mxu0
        %v250 = vadd.f32 0.0, %v249
        %v251 = vpop.f32.mrb[0].mxu0
        %v252 = vpop.f32.mrb[0].mxu0
        %v253 = vadd.f32 0.0, %v252
        %v254 = vpop.f32.mrb[0].mxu0
        %255 = vdwg.mxu0
        %v258 = vunpack.c.l.b16 %v172
        %v259 = vunpack.c.l.b16 %v173
        %v260 = vpack.c.b16 %v259, %v258
        %v261 = vsel %vm204, %v184, 0
        %v264 = vand.u32 %v260, %v211
        %266 = vmatprep.subr.bf16.mxu0 0
        %267 = vmatpush1.bf16.msra.mxu0 %v264
        %268 = vmatprep.subr.bf16.mxu0 0
        %269 = vmatpush1.bf16.msra.mxu0 0
        %270 = vmatprep.subr.bf16.mxu0 0
        %271 = vmatpush1.bf16.msra.mxu0 0
        %272 = vmatprep.subr.bf16.mxu0 0
        %273 = vmatpush1.bf16.msra.mxu0 0
        %274 = vmatprep.subr.bf16.mxu0 0
        %275 = vmatpush1.bf16.msra.mxu0 0
        %276 = vmatprep.subr.bf16.mxu0 0
        %277 = vmatpush1.bf16.msra.mxu0 0
        %278 = vmatprep.subr.bf16.mxu0 0
        %279 = vmatpush1.bf16.msra.mxu0 0
        %280 = vmatprep.subr.bf16.mxu0 0
        %281 = vmatpush1.bf16.msra.mxu0 0
        %282 = vmatprep.subr.bf16.mxu0 0
        %283 = vmatpush1.bf16.msra.mxu0 0
        %284 = vmatprep.subr.bf16.mxu0 0
        %285 = vmatpush1.bf16.msra.mxu0 0
        %286 = vmatprep.subr.bf16.mxu0 0
        %287 = vmatpush1.bf16.msra.mxu0 0
        %288 = vmatprep.subr.bf16.mxu0 0
        %289 = vmatpush1.bf16.msra.mxu0 0
        %290 = vmatprep.subr.bf16.mxu0 0
        %291 = vmatpush1.bf16.msra.mxu0 0
        %292 = vmatprep.subr.bf16.mxu0 0
        %293 = vmatpush1.bf16.msra.mxu0 0
        %294 = vmatprep.subr.bf16.mxu0 0
        %295 = vmatpush1.bf16.msra.mxu0 0
        %296 = vmatprep.subr.bf16.mxu0 0
        %297 = vmatpush1.bf16.msra.mxu0 0
        %298 = vmatprep.mubr.bf16.mxu0 0
        %299 = vmatmul.mubr.bf16.gmra.mrb[0].mxu0 %v261
        %v300 = vpop.f32.mrb[0].mxu0
        %v301 = vadd.f32 %v250, %v300
        %v302 = vpop.f32.mrb[0].mxu0
        %v303 = vpop.f32.mrb[0].mxu0
        %v304 = vadd.f32 %v253, %v303
        %v305 = vpop.f32.mrb[0].mxu0
        %306 = vdwg.mxu0
        %v307 = vld [vmem:[%s168] sm:$0xe]
        %s308 = scalar_lea.vmem %s1, 16
        %v309 = vld [vmem:[%s308] sm:$0xf]
        %v310 = vld [vmem:[%s308 + $0x4] sm:$0x7]
        %v312 = vunpack.c.l.b16 %v307
        %v313 = vpack.c.b16 %v182, %v312
        %vm314 = vcmask 1046528
        %v315 = vrot.slane %v313, 1
        %v316 = vrot.slane %v185, 1
        %v317 = vsel %vm314, %v315, %v316
        %v320 = vunpack.c.l.b16 %v309
        %v321 = vunpack.c.l.b16 %v310
        %v322 = vpack.c.b16 %v321, %v320
        %v324 = vsel %vm204, %v317, 0
        %v327 = vand.u32 %v322, %v211
        %329 = vmatprep.subr.bf16.mxu0 0
        %330 = vmatpush1.bf16.msra.mxu0 %v327
        %331 = vmatprep.subr.bf16.mxu0 0
        %332 = vmatpush1.bf16.msra.mxu0 0
        %333 = vmatprep.subr.bf16.mxu0 0
        %334 = vmatpush1.bf16.msra.mxu0 0
        %335 = vmatprep.subr.bf16.mxu0 0
        %336 = vmatpush1.bf16.msra.mxu0 0
        %337 = vmatprep.subr.bf16.mxu0 0
        %338 = vmatpush1.bf16.msra.mxu0 0
        %339 = vmatprep.subr.bf16.mxu0 0
        %340 = vmatpush1.bf16.msra.mxu0 0
        %341 = vmatprep.subr.bf16.mxu0 0
        %342 = vmatpush1.bf16.msra.mxu0 0
        %343 = vmatprep.subr.bf16.mxu0 0
        %344 = vmatpush1.bf16.msra.mxu0 0
        %345 = vmatprep.subr.bf16.mxu0 0
        %346 = vmatpush1.bf16.msra.mxu0 0
        %347 = vmatprep.subr.bf16.mxu0 0
        %348 = vmatpush1.bf16.msra.mxu0 0
        %349 = vmatprep.subr.bf16.mxu0 0
        %350 = vmatpush1.bf16.msra.mxu0 0
        %351 = vmatprep.subr.bf16.mxu0 0
        %352 = vmatpush1.bf16.msra.mxu0 0
        %353 = vmatprep.subr.bf16.mxu0 0
        %354 = vmatpush1.bf16.msra.mxu0 0
        %355 = vmatprep.subr.bf16.mxu0 0
        %356 = vmatpush1.bf16.msra.mxu0 0
        %357 = vmatprep.subr.bf16.mxu0 0
        %358 = vmatpush1.bf16.msra.mxu0 0
        %359 = vmatprep.subr.bf16.mxu0 0
        %360 = vmatpush1.bf16.msra.mxu0 0
        %361 = vmatprep.mubr.bf16.mxu0 0
        %362 = vmatmul.mubr.bf16.gmra.mrb[0].mxu0 %v324
        %v363 = vpop.f32.mrb[0].mxu0
        %v364 = vadd.f32 0.0, %v363
        %v365 = vpop.f32.mrb[0].mxu0
        %v366 = vpop.f32.mrb[0].mxu0
        %v367 = vadd.f32 0.0, %v366
        %v368 = vpop.f32.mrb[0].mxu0
        %369 = vdwg.mxu0
        %v370 = vadd.f32 %v301, %v364
        %v371 = vadd.f32 %v304, %v367
        %v372 = vld [vmem:[%s2] sm:$0x1]
        %v374 = vlaneseq
        %v375 = vshrl.u32 %v374, 7
        %v376 = vsub.s32 0, %v375
        %v377 = vrot.slane %v372, %v376
        %v379 = vadd.f32 %v370, %v377
        %v380 = vadd.f32 %v371, %v377
        %v381 = vmax.f32 %v379, 0.0
        %v382 = vmax.f32 %v380, 0.0
        %v383 = vpack.c.bf16 %v382, %v381
        %v385 = vunpack.c.l.b16 %v383
        %v386 = vunpack.c.h.b16 %v383
        %v387 = vpack.c.b16 %v385, %v385
        %v388 = vpack.c.b16 %v386, %v386
        %391 = vst [vmem:[%s163] sm:$0xf] %v387
        %392 = vst [vmem:[%s163 + $0x4] sm:$0xf] %v388
        %s393 = sand.u32 %s93, 1
        %s394 = scalar_lea.sflag [#allocation3], %s393
        %s395 = sand.u32 %s93, 1
        %s396 = smul.addr %s395, 8
        %s397 = scalar_lea.vmem [#allocation2], %s396
        // Predicated region
        $region33: #{tpu_custom_call.1} parent=31 // pred_check
          %p398 = pneg %p103
        $region34: #{tpu_custom_call.1} parent=31 // pred_check_branch
          %400 = sbr.rel (%p398) target = $region36
        $region35: #{tpu_custom_call.1} parent=31 // pred_region
          %s402 = ssub.s32 128, 128
          %403 = vsyncadd %s394, %s402
          %s404 = smul.addr %s17, 2
          %s405 = smul.addr %s404, 64
          %s406 = scalar_lea.hbm %s3, %s405
          %s407 = sshll.u32 %s397, 4
          %s408 = int_to_ptr.vmem [resolvable:$true] %s407
          %413 = dma.vmem_to_hbm [thread:$0]  %s408, 128, %s406, %s394, 64, 64, 4
        $region36: #{tpu_custom_call.1} parent=31 // pred_fallthru
          _
      $region32: #{tpu_custom_call.1} parent=5 // pred_fallthru
        _
      %p414 = scmp.le.s32.totalorder 2, %s12
      // Predicated region
      $region37: #{tpu_custom_call.1} parent=5 // pred_check
        %p415 = pneg %p414
      $region38: #{tpu_custom_call.1} parent=5 // pred_check_branch
        %417 = sbr.rel (%p415) target = $region40
      $region39: #{tpu_custom_call.1} parent=5 // pred_region
        %s418 = ssub.s32 %s12, 2
        // Predicated region
        $region41: #{tpu_custom_call.1} parent=39 // pred_check
          %p419 = pneg %p109
        $region42: #{tpu_custom_call.1} parent=39 // pred_check_branch
          %421 = sbr.rel (%p419) target = $region44
        $region43: #{tpu_custom_call.1} parent=39 // pred_region
          %s422 = sand.u32 %s94, 1
          %s423 = scalar_lea.sflag [#allocation3], %s422
          %s424 = sand.u32 %s94, 1
          %s425 = smul.addr %s424, 8
          %s426 = scalar_lea.vmem [#allocation2], %s425
          %427 = dma.done %s423, 128
        $region44: #{tpu_custom_call.1} parent=39 // pred_fallthru
          _
      $region40: #{tpu_custom_call.1} parent=5 // pred_fallthru
        _
    $region6: #{tpu_custom_call.1} parent=1 // loop_footer
      %s16 = sadd.s32 1, %s12
    $region7: #{tpu_custom_call.1} parent=1 // loop_footer_branch
      %11 = sbr.rel target = $region3
    $region8: #{tpu_custom_call.1} parent=1 // loop_exit
      _
    %428 = vsyncpa [#allocation3], 1
    %s429 = scalar_lea.sflag [#allocation3], 1
    %430 = vsyncpa %s429, 1

</llo_original>
